<compile_context>
chip_gen: v6e
topology: v6e:2x2x1
jax: 0.10.0
libtpu: 0.0.40
codegen_flags: <defaults>
</compile_context>

<pallas_src>
import jax
import jax.numpy as jnp
from jax.experimental import pallas as pl
from jax.experimental.pallas import tpu as pltpu


def _linear_diff_kernel(x2_ref, w1_ref, b1_ref, w2_ref, b2_ref, o_ref):
    # x2_ref: (S*Bp, E)  bf16 -- row s*Bp + b holds x[s, b, :]
    # w1_ref: (E, Hp)    bf16 -- pre-scaled by 1/S (mean folded into the weight)
    # b1_ref: (1, Hp)    f32
    # w2_ref: (Hp, Vp)   bf16
    # b2_ref: (1, Vp)    f32
    # o_ref : (Bp, Vp)   f32
    bp = o_ref.shape[0]
    hp = w1_ref.shape[1]
    s_len = x2_ref.shape[0] // bp

    # Linear1 on every (s, b) row at once: one MXU pass with S*Bp LHS rows,
    # f32 accumulation.
    z = jnp.dot(x2_ref[...], w1_ref[...],
                preferred_element_type=jnp.float32)           # (S*Bp, Hp) f32

    # mean over dim 0 (1/S already folded into w1): tree-reduce the segment sum
    # over s on the lane-dense f32 matmul output (no dependent S-1 add chain).
    h = jnp.sum(z.reshape(s_len, bp, hp), axis=0)             # (Bp, Hp) f32

    h = h + b1_ref[...]
    # Dropout(p=0.1): identity in eval/inference mode.
    # TODO(synk): training-mode dropout (PRNG mask + 1/(1-p) scaling) not implemented.
    h = jnp.maximum(h, 0.0)

    out = jnp.dot(h.astype(jnp.bfloat16), w2_ref[...],
                  preferred_element_type=jnp.float32)          # (Bp, Vp) f32
    o_ref[...] = (out + b2_ref[...]).astype(o_ref.dtype)


def _round_up(n, m):
    return ((n + m - 1) // m) * m


def make_torch_linear_diff_forward(w1, b1, w2, b2, seq_len):
    """Build a jitted forward for fixed weights.

    w1: (E, H), b1: (H,), w2: (H, V), b2: (V,)  -- nn.Linear params pre-transposed
    to (in, out). seq_len is the S the mean runs over (folded into w1).

    Returns forward(x) with x: (S, B, E) f32 -> (B, V) f32.
    """
    E, H = w1.shape
    V = w2.shape[1]
    SUB, LANE = 8, 128
    Hp = _round_up(H, LANE)
    Vp = _round_up(V, LANE)

    # -------- one-time parameter prep (runs here, never in the per-call path):
    # fold 1/S of the mean into W1, zero-pad to lane-aligned shapes, store the
    # MXU operands in bf16 (f32 accumulation happens in-kernel).
    w1_p = jnp.pad(w1 * (1.0 / seq_len), ((0, 0), (0, Hp - H))).astype(jnp.bfloat16)
    b1_p = jnp.pad(b1, (0, Hp - H)).reshape(1, Hp).astype(jnp.float32)
    w2_p = jnp.pad(w2, ((0, Hp - H), (0, Vp - V))).astype(jnp.bfloat16)
    b2_p = jnp.pad(b2, (0, Vp - V)).reshape(1, Vp).astype(jnp.float32)
    w1_p, b1_p, w2_p, b2_p = jax.block_until_ready((w1_p, b1_p, w2_p, b2_p))

    @jax.jit
    def forward(x):
        S, B, E_ = x.shape
        assert E_ == E
        Bp = _round_up(B, SUB)

        # Present x MXU-friendly: pad batch to the sublane count, collapse
        # (S, Bp, E) -> (S*Bp, E) so the first matmul sees S*Bp LHS rows, cast
        # the MXU operand to bf16. Under jit these collapse into one fusion;
        # allow_input_fusion lets XLA fold that fusion into the pallas_call
        # input instead of materializing x2 in HBM.
        x_p = jnp.pad(x, ((0, 0), (0, Bp - B), (0, 0)))
        x2 = x_p.reshape(S * Bp, E).astype(jnp.bfloat16)

        cost = pl.CostEstimate(
            flops=2 * S * Bp * E * Hp + 2 * Bp * Hp * Vp,
            transcendentals=0,
            bytes_accessed=(S * Bp * E * 2 + E * Hp * 2 + Hp * 4
                            + Hp * Vp * 2 + Vp * 4 + Bp * Vp * 4),
        )

        out_p = pl.pallas_call(
            _linear_diff_kernel,
            out_shape=jax.ShapeDtypeStruct((Bp, Vp), jnp.float32),
            # Tiny problem: single full-extent VMEM block per operand (the
            # aligned ones are (8,128)-dense; full-extent blocks are exempt
            # from the divisibility rule anyway). No grid / pipeline needed.
            in_specs=[
                pl.BlockSpec((S * Bp, E), lambda: (0, 0)),
                pl.BlockSpec((E, Hp), lambda: (0, 0)),
                pl.BlockSpec((1, Hp), lambda: (0, 0)),
                pl.BlockSpec((Hp, Vp), lambda: (0, 0)),
                pl.BlockSpec((1, Vp), lambda: (0, 0)),
            ],
            out_specs=pl.BlockSpec((Bp, Vp), lambda: (0, 0)),
            compiler_params=pltpu.CompilerParams(
                # Only x2 has producers (the weights are jit-time constants).
                allow_input_fusion=[True, False, False, False, False],
            ),
            cost_estimate=cost,
        )(x2, w1_p, b1_p, w2_p, b2_p)

        # Lane-dense padded store in-kernel; slice to logical shape out here.
        return out_p[:B, :V]

    return forward


if __name__ == "__main__":
    # Small shapes consistent with the module.
    seq, batch = 8, 2
    embedding_size, hidden_size, vocab_size = 32, 64, 128

    key = jax.random.PRNGKey(0)
    kx, kw1, kb1, kw2, kb2 = jax.random.split(key, 5)

    x = jax.random.normal(kx, (seq, batch, embedding_size), dtype=jnp.float32)

    # nn.Linear params (W: (out, in), b: (out,)) stored pre-transposed as (in, out).
    w1 = jax.random.normal(kw1, (embedding_size, hidden_size), dtype=jnp.float32) * 0.05
    b1 = jax.random.normal(kb1, (hidden_size,), dtype=jnp.float32) * 0.05
    w2 = jax.random.normal(kw2, (hidden_size, vocab_size), dtype=jnp.float32) * 0.05
    b2 = jax.random.normal(kb2, (vocab_size,), dtype=jnp.float32) * 0.05

    # One-time prep; the returned jitted forward closes over prepared weights.
    forward = make_torch_linear_diff_forward(w1, b1, w2, b2, seq_len=seq)

    out = forward(x)
    out = jax.block_until_ready(out)

    # Pure-JAX f32 reference (dropout is identity in eval mode).
    xm = jnp.mean(x, axis=0)
    ref = jnp.maximum(xm @ w1 + b1, 0.0) @ w2 + b2

    assert out.shape == (batch, vocab_size)
    # bf16 MXU operands with f32 accumulation -> bf16-appropriate tolerance.
    assert jnp.allclose(out, ref, atol=1e-2, rtol=1e-2), \
        float(jnp.max(jnp.abs(out - ref)))

    print("KERNEL_OK")
</pallas_src>

<mosaic_0001>
module attributes {stable_mosaic.version = 11 : i64} {
  func.func @_linear_diff_kernel(%arg0: memref<64x32xbf16, #tpu.memory_space<vmem>>, %arg1: memref<32x128xbf16, #tpu.memory_space<vmem>>, %arg2: memref<1x128xf32, #tpu.memory_space<vmem>>, %arg3: memref<128x128xbf16, #tpu.memory_space<vmem>>, %arg4: memref<1x128xf32, #tpu.memory_space<vmem>>, %arg5: memref<8x128xf32, #tpu.memory_space<vmem>>) attributes {dimension_semantics = [], scalar_prefetch = 0 : i64, scratch_operands = 0 : i64, tpu.core_type = #tpu.core_type<tc>} {
    %c0 = arith.constant 0 : index
    %c0_0 = arith.constant 0 : index
    %0 = vector.load %arg0[%c0, %c0_0] : memref<64x32xbf16, #tpu.memory_space<vmem>>, vector<64x32xbf16>
    %c0_1 = arith.constant 0 : index
    %c0_2 = arith.constant 0 : index
    %1 = vector.load %arg1[%c0_1, %c0_2] : memref<32x128xbf16, #tpu.memory_space<vmem>>, vector<32x128xbf16>
    %cst = arith.constant dense<0.000000e+00> : vector<64x128xf32>
    %2 = tpu.matmul %0, %1, %cst {dimension_numbers = #tpu.dot_dimension_numbers<[1], [0], [0], [1], [0, 0, 1, 1], [], []>} : vector<64x32xbf16>, vector<32x128xbf16>, vector<64x128xf32> -> vector<64x128xf32>
    %3 = vector.shape_cast %2 : vector<64x128xf32> to vector<8x8x128xf32>
    %cst_3 = arith.constant dense<0.000000e+00> : vector<8x128xf32>
    %4 = vector.multi_reduction <add>, %3, %cst_3 [0] : vector<8x8x128xf32> to vector<8x128xf32>
    %c0_4 = arith.constant 0 : index
    %c0_5 = arith.constant 0 : index
    %5 = vector.load %arg2[%c0_4, %c0_5] : memref<1x128xf32, #tpu.memory_space<vmem>>, vector<1x128xf32>
    %6 = vector.broadcast %5 : vector<1x128xf32> to vector<8x128xf32>
    %7 = arith.addf %4, %6 : vector<8x128xf32>
    %cst_6 = arith.constant 0.000000e+00 : f32
    %8 = vector.broadcast %cst_6 : f32 to vector<8x128xf32>
    %9 = arith.maximumf %7, %8 : vector<8x128xf32>
    %10 = arith.truncf %9 : vector<8x128xf32> to vector<8x128xbf16>
    %c0_7 = arith.constant 0 : index
    %c0_8 = arith.constant 0 : index
    %11 = vector.load %arg3[%c0_7, %c0_8] : memref<128x128xbf16, #tpu.memory_space<vmem>>, vector<128x128xbf16>
    %cst_9 = arith.constant dense<0.000000e+00> : vector<8x128xf32>
    %12 = tpu.matmul %10, %11, %cst_9 {dimension_numbers = #tpu.dot_dimension_numbers<[1], [0], [0], [1], [0, 0, 1, 1], [], []>} : vector<8x128xbf16>, vector<128x128xbf16>, vector<8x128xf32> -> vector<8x128xf32>
    %c0_10 = arith.constant 0 : index
    %c0_11 = arith.constant 0 : index
    %13 = vector.load %arg4[%c0_10, %c0_11] : memref<1x128xf32, #tpu.memory_space<vmem>>, vector<1x128xf32>
    %14 = vector.broadcast %13 : vector<1x128xf32> to vector<8x128xf32>
    %15 = arith.addf %12, %14 : vector<8x128xf32>
    %c0_12 = arith.constant 0 : index
    %c0_13 = arith.constant 0 : index
    %16 = vector.load %arg5[%c0_12, %c0_13] : memref<8x128xf32, #tpu.memory_space<vmem>>, vector<8x128xf32>
    tpu.vector_store %arg5[%c0_12, %c0_13], %15 {strides = array<i32>} : memref<8x128xf32, #tpu.memory_space<vmem>>, vector<8x128xf32>,
    return
  }
}

</mosaic_0001>

<llo_original>
// kernel: forward.2
$region0: #{forward.2}
  #allocation0 [shape = 'u32[]', space=smem, size = 0x4, offset = 0x4, fixed_abs, tag = 'smem constant byte address 0x4 - core index']
  #allocation1 [shape = 'u32[144,128]{1,0:T(1,128)}', space=vmem, size = 0x12000, scoped, tag = 'internal scratch']
  #allocation2 [shape = 'u32[2048]{0}', space=vmem, size = 0x2000, scoped, tag = 'scoped memory for forward.2']
  #allocation3 [shape = 'u32[2048]{0}', space=vmem, size = 0x2000, scoped, tag = 'scoped memory for forward.2']
  #allocation4 [shape = 'u32[2048]{0}', space=vmem, size = 0x2000, scoped, tag = 'scoped memory for forward.2']
  #allocation5 [shape = 'u32[2048]{0}', space=vmem, size = 0x2000, scoped, tag = 'scoped memory for forward.2']
  #allocation6 [shape = 'u32[2048]{0}', space=vmem, size = 0x2000, scoped, tag = 'scoped memory for forward.2']
  %s0 = inlined_call_operand.vmem [shape: bf16[32,128], index: 0, kind: input, shape index: {}]
  %s1 = inlined_call_operand.vmem [shape: f32[1,128], index: 1, kind: input, shape index: {}]
  %s2 = inlined_call_operand.hbm [shape: bf16[128,128], index: 2, kind: input, shape index: {}]
  %s3 = inlined_call_operand.vmem [shape: f32[1,128], index: 3, kind: input, shape index: {}]
  %s4 = inlined_call_operand.vmem [shape: bf16[8,2,32], index: 4, kind: input, shape index: {}]
  %s5 = inlined_call_operand.<no memory space> [shape: bf16[], index: 5, kind: input, shape index: {}]
  %s6 = inlined_call_operand.vmem [shape: f32[8,128], index: 6, kind: output, shape index: {}]
  %s7 = sld [smem:[#allocation0]]
  $region34: #{forward.2} parent=0
    _
  %s9 = ssub.s32 1, %s7
  %s10 = scalar_select 0, %s9, %s7
  %v11 = vstv %s5
  %v12 = vunpack.i.l.bf16 %v11
  %v14 = vunpack.i.h.bf16 %v11
  $region1: #{forward.2} parent=0
    #allocation7 [shape = 'u8[32768]{0}', space=vmem, size = 0x8000, scoped, tag = 'input window, operand 3, single buffered']
    #allocation8 [shape = 's32[1]{0}', space=sflag, size = 0x4, scoped, tag = 'scoped memory for forward.2']
    #allocation9 [shape = 'u8[16384]{0}', space=vmem, size = 0x4000, dematerialized = true, scoped, tag = 'FusionAdapter Buffer %fusion.1 = bf16[64,32]{1,0:T(8,128)(2,1)} fusion(%param_4.2, %param_5), kind=kLoop, calls=%fused_computation.1.clone, metadata={op_name="jit(forward)/convert_element_type" stack_frame_id=8}']
    %16 = vsyncpa [#allocation8], 0
    // Predicated region
    $region2: #{forward.2} parent=1 // pred_check
      _
    $region3: #{forward.2} parent=1 // pred_check_branch
      %18 = sbr.rel (0) target = $region5
    $region4: #{forward.2} parent=1 // pred_region
      _
    $region5: #{forward.2} parent=1 // pred_fallthru
      _
    // Predicated region
    $region6: #{forward.2} parent=1 // pred_check
      _
    $region7: #{forward.2} parent=1 // pred_check_branch
      %20 = sbr.rel (0) target = $region9
    $region8: #{forward.2} parent=1 // pred_region
      _
    $region9: #{forward.2} parent=1 // pred_fallthru
      _
    // Predicated region
    $region10: #{forward.2} parent=1 // pred_check
      _
    $region11: #{forward.2} parent=1 // pred_check_branch
      %22 = sbr.rel (0) target = $region13
    $region12: #{forward.2} parent=1 // pred_region
      _
    $region13: #{forward.2} parent=1 // pred_fallthru
      _
    // Predicated region
    $region14: #{forward.2} parent=1 // pred_check
      _
    $region15: #{forward.2} parent=1 // pred_check_branch
      %24 = sbr.rel (0) target = $region17
    $region16: #{forward.2} parent=1 // pred_region
      %s26 = ssub.s32 1024, 1024
      %27 = vsyncadd [#allocation8], %s26
      %s28 = sshll.u32 [#allocation7], 4
      %s29 = int_to_ptr.vmem [resolvable:$true] %s28
      %34 = dma.hbm_to_vmem [thread:$0]  %s2, 1024, %s29, [#allocation8], 64, 64, 4
    $region17: #{forward.2} parent=1 // pred_fallthru
      _
    // Predicated region
    $region18: #{forward.2} parent=1 // pred_check
      _
    $region19: #{forward.2} parent=1 // pred_check_branch
      %36 = sbr.rel (0) target = $region21
    $region20: #{forward.2} parent=1 // pred_region
      _
    $region21: #{forward.2} parent=1 // pred_fallthru
      _
    // Predicated region
    $region22: #{forward.2} parent=1 // pred_check
      _
    $region23: #{forward.2} parent=1 // pred_check_branch
      %38 = sbr.rel (0) target = $region25
    $region24: #{forward.2} parent=1 // pred_region
      %39 = dma.done [#allocation8], 1024
    $region25: #{forward.2} parent=1 // pred_fallthru
      _
    %s41 = sor.u32 3, 1
    %s42 = sand.u32 %s41, 1
    %v43 = vld [vmem:[%s4] sm:%s42]
    %v44 = vunpack.c.l.bf16 %v43
    %v45 = vunpack.c.h.bf16 %v43
    %v46 = vlaneseq
    %v47 = vshrl.u32 %v46, 7
    %vm49 = vcmp.lt.s32.totalorder %v47, 2
    %v50 = vsel %vm49, %v44, %v12
    %v51 = vlaneseq
    %v52 = vand.u32 %v51, 127
    %vm54 = vcmp.lt.s32.totalorder %v52, 32
    %v55 = vsel %vm54, %v50, %v12
    %v56 = vpack.c.bf16 0.0, %v55
    %s58 = ssub.s32 16, 1
    %59 = vst [vmem:[#allocation9] sm:%s58] %v56
    %s60 = scalar_lea.vmem %s4, 1
    %s62 = sor.u32 3, 1
    %s63 = sand.u32 %s62, 1
    %v64 = vld [vmem:[%s60] sm:%s63]
    %v65 = vunpack.c.l.bf16 %v64
    %v66 = vunpack.c.h.bf16 %v64
    %v67 = vlaneseq
    %v68 = vshrl.u32 %v67, 7
    %vm70 = vcmp.lt.s32.totalorder %v68, 2
    %v71 = vsel %vm70, %v65, %v12
    %v72 = vlaneseq
    %v73 = vand.u32 %v72, 127
    %vm75 = vcmp.lt.s32.totalorder %v73, 32
    %v76 = vsel %vm75, %v71, %v12
    %s77 = scalar_lea.vmem [#allocation9], 4
    %v78 = vpack.c.bf16 0.0, %v76
    %s80 = ssub.s32 16, 1
    %81 = vst [vmem:[%s77] sm:%s80] %v78
    %s82 = scalar_lea.vmem %s4, 2
    %s84 = sor.u32 3, 1
    %s85 = sand.u32 %s84, 1
    %v86 = vld [vmem:[%s82] sm:%s85]
    %v87 = vunpack.c.l.bf16 %v86
    %v88 = vunpack.c.h.bf16 %v86
    %v89 = vlaneseq
    %v90 = vshrl.u32 %v89, 7
    %vm92 = vcmp.lt.s32.totalorder %v90, 2
    %v93 = vsel %vm92, %v87, %v12
    %v94 = vlaneseq
    %v95 = vand.u32 %v94, 127
    %vm97 = vcmp.lt.s32.totalorder %v95, 32
    %v98 = vsel %vm97, %v93, %v12
    %s99 = scalar_lea.vmem [#allocation9], 8
    %v100 = vpack.c.bf16 0.0, %v98
    %s102 = ssub.s32 16, 1
    %103 = vst [vmem:[%s99] sm:%s102] %v100
    %s104 = scalar_lea.vmem %s4, 3
    %s106 = sor.u32 3, 1
    %s107 = sand.u32 %s106, 1
    %v108 = vld [vmem:[%s104] sm:%s107]
    %v109 = vunpack.c.l.bf16 %v108
    %v110 = vunpack.c.h.bf16 %v108
    %v111 = vlaneseq
    %v112 = vshrl.u32 %v111, 7
    %vm114 = vcmp.lt.s32.totalorder %v112, 2
    %v115 = vsel %vm114, %v109, %v12
    %v116 = vlaneseq
    %v117 = vand.u32 %v116, 127
    %vm119 = vcmp.lt.s32.totalorder %v117, 32
    %v120 = vsel %vm119, %v115, %v12
    %s121 = scalar_lea.vmem [#allocation9], 12
    %v122 = vpack.c.bf16 0.0, %v120
    %s124 = ssub.s32 16, 1
    %125 = vst [vmem:[%s121] sm:%s124] %v122
    %s126 = scalar_lea.vmem %s4, 4
    %s128 = sor.u32 3, 1
    %s129 = sand.u32 %s128, 1
    %v130 = vld [vmem:[%s126] sm:%s129]
    %v131 = vunpack.c.l.bf16 %v130
    %v132 = vunpack.c.h.bf16 %v130
    %v133 = vlaneseq
    %v134 = vshrl.u32 %v133, 7
    %vm136 = vcmp.lt.s32.totalorder %v134, 2
    %v137 = vsel %vm136, %v131, %v12
    %v138 = vlaneseq
    %v139 = vand.u32 %v138, 127
    %vm141 = vcmp.lt.s32.totalorder %v139, 32
    %v142 = vsel %vm141, %v137, %v12
    %s143 = scalar_lea.vmem [#allocation9], 16
    %v144 = vpack.c.bf16 0.0, %v142
    %s146 = ssub.s32 16, 1
    %147 = vst [vmem:[%s143] sm:%s146] %v144
    %s148 = scalar_lea.vmem %s4, 5
    %s150 = sor.u32 3, 1
    %s151 = sand.u32 %s150, 1
    %v152 = vld [vmem:[%s148] sm:%s151]
    %v153 = vunpack.c.l.bf16 %v152
    %v154 = vunpack.c.h.bf16 %v152
    %v155 = vlaneseq
    %v156 = vshrl.u32 %v155, 7
    %vm158 = vcmp.lt.s32.totalorder %v156, 2
    %v159 = vsel %vm158, %v153, %v12
    %v160 = vlaneseq
    %v161 = vand.u32 %v160, 127
    %vm163 = vcmp.lt.s32.totalorder %v161, 32
    %v164 = vsel %vm163, %v159, %v12
    %s165 = scalar_lea.vmem [#allocation9], 20
    %v166 = vpack.c.bf16 0.0, %v164
    %s168 = ssub.s32 16, 1
    %169 = vst [vmem:[%s165] sm:%s168] %v166
    %s170 = scalar_lea.vmem %s4, 6
    %s172 = sor.u32 3, 1
    %s173 = sand.u32 %s172, 1
    %v174 = vld [vmem:[%s170] sm:%s173]
    %v175 = vunpack.c.l.bf16 %v174
    %v176 = vunpack.c.h.bf16 %v174
    %v177 = vlaneseq
    %v178 = vshrl.u32 %v177, 7
    %vm180 = vcmp.lt.s32.totalorder %v178, 2
    %v181 = vsel %vm180, %v175, %v12
    %v182 = vlaneseq
    %v183 = vand.u32 %v182, 127
    %vm185 = vcmp.lt.s32.totalorder %v183, 32
    %v186 = vsel %vm185, %v181, %v12
    %s187 = scalar_lea.vmem [#allocation9], 24
    %v188 = vpack.c.bf16 0.0, %v186
    %s190 = ssub.s32 16, 1
    %191 = vst [vmem:[%s187] sm:%s190] %v188
    %s192 = scalar_lea.vmem %s4, 7
    %s194 = sor.u32 3, 1
    %s195 = sand.u32 %s194, 1
    %v196 = vld [vmem:[%s192] sm:%s195]
    %v197 = vunpack.c.l.bf16 %v196
    %v198 = vunpack.c.h.bf16 %v196
    %v199 = vlaneseq
    %v200 = vshrl.u32 %v199, 7
    %vm202 = vcmp.lt.s32.totalorder %v200, 2
    %v203 = vsel %vm202, %v197, %v12
    %v204 = vlaneseq
    %v205 = vand.u32 %v204, 127
    %vm207 = vcmp.lt.s32.totalorder %v205, 32
    %v208 = vsel %vm207, %v203, %v12
    %s209 = scalar_lea.vmem [#allocation9], 28
    %v210 = vpack.c.bf16 0.0, %v208
    %s212 = ssub.s32 16, 1
    %213 = vst [vmem:[%s209] sm:%s212] %v210
    %v215 = vld [vmem:[#allocation9] sm:$0xf]
    %v216 = vld [vmem:[#allocation9 + $0x4] sm:$0xf]
    %v217 = vld [vmem:[#allocation9 + $0x8] sm:$0xf]
    %v218 = vld [vmem:[#allocation9 + $0xc] sm:$0xf]
    %v219 = vld [vmem:[#allocation9 + $0x10] sm:$0xf]
    %v220 = vld [vmem:[#allocation9 + $0x14] sm:$0xf]
    %v221 = vld [vmem:[#allocation9 + $0x18] sm:$0xf]
    %v222 = vld [vmem:[#allocation9 + $0x1c] sm:$0xf]
    %v223 = vld [vmem:[%s0] sm:$0xf]
    %v224 = vld [vmem:[%s0 + $0x4] sm:$0xf]
    %v225 = vld [vmem:[%s0 + $0x8] sm:$0xf]
    %v226 = vld [vmem:[%s0 + $0xc] sm:$0xf]
    %v235 = vunpack.c.l.b16 %v215
    %v236 = vunpack.c.l.b16 %v216
    %v237 = vunpack.c.l.b16 %v217
    %v238 = vunpack.c.l.b16 %v218
    %v239 = vunpack.c.l.b16 %v219
    %v240 = vunpack.c.l.b16 %v220
    %v241 = vunpack.c.l.b16 %v221
    %v242 = vunpack.c.l.b16 %v222
    %v243 = vpack.c.b16 %v236, %v235
    %v244 = vpack.c.b16 %v238, %v237
    %v245 = vpack.c.b16 %v240, %v239
    %v246 = vpack.c.b16 %v242, %v241
    %v251 = vunpack.c.l.b16 %v223
    %v252 = vunpack.c.l.b16 %v224
    %v253 = vunpack.c.l.b16 %v225
    %v254 = vunpack.c.l.b16 %v226
    %v255 = vpack.c.b16 %v252, %v251
    %v256 = vpack.c.b16 %v254, %v253
    %vm259 = vcmask 261120
    %v261 = vsel %vm259, %v243, 0
    %v264 = vsel %vm259, %v244, 0
    %v267 = vsel %vm259, %v245, 0
    %v270 = vsel %vm259, %v246, 0
    %272 = vmatprep.subr.bf16.mxu0 0
    %273 = vmatpush1.bf16.msra.mxu0 0
    %274 = vmatprep.subr.bf16.mxu0 0
    %275 = vmatpush1.bf16.msra.mxu0 0
    %276 = vmatprep.subr.bf16.mxu0 0
    %277 = vmatpush1.bf16.msra.mxu0 0
    %278 = vmatprep.subr.bf16.mxu0 0
    %279 = vmatpush1.bf16.msra.mxu0 0
    %280 = vmatprep.subr.bf16.mxu0 0
    %281 = vmatpush1.bf16.msra.mxu0 0
    %282 = vmatprep.subr.bf16.mxu0 0
    %283 = vmatpush1.bf16.msra.mxu0 0
    %284 = vmatprep.subr.bf16.mxu0 0
    %285 = vmatpush1.bf16.msra.mxu0 %v256
    %286 = vmatprep.subr.bf16.mxu0 0
    %287 = vmatpush1.bf16.msra.mxu0 %v255
    %288 = vmatprep.subr.bf16.mxu0 0
    %289 = vmatpush2.bf16.msra.mxu0 0
    %290 = vmatprep.subr.bf16.mxu0 0
    %291 = vmatpush2.bf16.msra.mxu0 0
    %292 = vmatprep.subr.bf16.mxu0 0
    %293 = vmatpush2.bf16.msra.mxu0 0
    %294 = vmatprep.subr.bf16.mxu0 0
    %295 = vmatpush2.bf16.msra.mxu0 0
    %296 = vmatprep.subr.bf16.mxu0 0
    %297 = vmatpush2.bf16.msra.mxu0 0
    %298 = vmatprep.subr.bf16.mxu0 0
    %299 = vmatpush2.bf16.msra.mxu0 0
    %300 = vmatprep.subr.bf16.mxu0 0
    %301 = vmatpush2.bf16.msra.mxu0 0
    %302 = vmatprep.subr.bf16.mxu0 0
    %303 = vmatpush2.bf16.msra.mxu0 0
    %304 = vmatprep.mubr.bf16.mxu0 0
    %305 = vmatmul.mubr.bf16.gmra.mxu0 %v261
    %v306 = vpop.f32.mrf.mxu0
    %v307 = vadd.f32 0.0, %v306
    %v308 = vpop.f32.mrf.mxu0
    %v309 = vpop.f32.mrf.mxu0
    %v310 = vadd.f32 0.0, %v309
    %v311 = vpop.f32.mrf.mxu0
    %312 = vmatprep.mubr.bf16.mxu0 0
    %313 = vmatmul.mubr.bf16.gmra.mxu0 %v264
    %v314 = vpop.f32.mrf.mxu0
    %v315 = vadd.f32 0.0, %v314
    %v316 = vpop.f32.mrf.mxu0
    %v317 = vpop.f32.mrf.mxu0
    %v318 = vadd.f32 0.0, %v317
    %v319 = vpop.f32.mrf.mxu0
    %320 = vmatprep.mubr.bf16.mxu0 0
    %321 = vmatmul.mubr.bf16.gmra.mxu0 %v267
    %v322 = vpop.f32.mrf.mxu0
    %v323 = vadd.f32 0.0, %v322
    %v324 = vpop.f32.mrf.mxu0
    %v325 = vpop.f32.mrf.mxu0
    %v326 = vadd.f32 0.0, %v325
    %v327 = vpop.f32.mrf.mxu0
    %328 = vmatprep.mubr.bf16.mxu0 0
    %329 = vmatmul.mubr.bf16.gmra.mxu0 %v270
    %v330 = vpop.f32.mrf.mxu0
    %v331 = vadd.f32 0.0, %v330
    %v332 = vpop.f32.mrf.mxu0
    %v333 = vpop.f32.mrf.mxu0
    %v334 = vadd.f32 0.0, %v333
    %v335 = vpop.f32.mrf.mxu0
    %336 = vdwg.mxu0
    %v337 = vadd.f32 %v307, %v310
    %v338 = vadd.f32 %v337, %v315
    %v339 = vadd.f32 %v338, %v318
    %v340 = vadd.f32 %v339, %v323
    %v341 = vadd.f32 %v340, %v326
    %v342 = vadd.f32 %v341, %v331
    %v343 = vadd.f32 %v342, %v334
    %v344 = vld [vmem:[%s1] sm:$0x1]
    %v346 = vlaneseq
    %v347 = vshrl.u32 %v346, 7
    %v348 = vsub.s32 0, %v347
    %v349 = vrot.slane %v344, %v348
    %v351 = vadd.f32 %v343, %v349
    %v352 = vmax.f32 %v351, 0.0
    %v353 = vpack.c.bf16 %v352, %v352
    %v354 = vld [vmem:[#allocation7] sm:$0xf]
    %v355 = vld [vmem:[#allocation7 + $0x4] sm:$0xf]
    %v356 = vld [vmem:[#allocation7 + $0x8] sm:$0xf]
    %v357 = vld [vmem:[#allocation7 + $0xc] sm:$0xf]
    %v358 = vld [vmem:[#allocation7 + $0x10] sm:$0xf]
    %v359 = vld [vmem:[#allocation7 + $0x14] sm:$0xf]
    %v360 = vld [vmem:[#allocation7 + $0x18] sm:$0xf]
    %v361 = vld [vmem:[#allocation7 + $0x1c] sm:$0xf]
    %v362 = vld [vmem:[#allocation7 + $0x20] sm:$0xf]
    %v363 = vld [vmem:[#allocation7 + $0x24] sm:$0xf]
    %v364 = vld [vmem:[#allocation7 + $0x28] sm:$0xf]
    %v365 = vld [vmem:[#allocation7 + $0x2c] sm:$0xf]
    %v366 = vld [vmem:[#allocation7 + $0x30] sm:$0xf]
    %v367 = vld [vmem:[#allocation7 + $0x34] sm:$0xf]
    %v368 = vld [vmem:[#allocation7 + $0x38] sm:$0xf]
    %v369 = vld [vmem:[#allocation7 + $0x3c] sm:$0xf]
    %v370 = vld [vmem:[%s3] sm:$0x1]
    %v372 = vlaneseq
    %v373 = vshrl.u32 %v372, 7
    %v374 = vsub.s32 0, %v373
    %v375 = vrot.slane %v370, %v374
    %v393 = vunpack.c.l.b16 %v354
    %v394 = vunpack.c.l.b16 %v355
    %v395 = vunpack.c.l.b16 %v356
    %v396 = vunpack.c.l.b16 %v357
    %v397 = vunpack.c.l.b16 %v358
    %v398 = vunpack.c.l.b16 %v359
    %v399 = vunpack.c.l.b16 %v360
    %v400 = vunpack.c.l.b16 %v361
    %v401 = vunpack.c.l.b16 %v362
    %v402 = vunpack.c.l.b16 %v363
    %v403 = vunpack.c.l.b16 %v364
    %v404 = vunpack.c.l.b16 %v365
    %v405 = vunpack.c.l.b16 %v366
    %v406 = vunpack.c.l.b16 %v367
    %v407 = vunpack.c.l.b16 %v368
    %v408 = vunpack.c.l.b16 %v369
    %v409 = vpack.c.b16 %v394, %v393
    %v410 = vpack.c.b16 %v396, %v395
    %v411 = vpack.c.b16 %v398, %v397
    %v412 = vpack.c.b16 %v400, %v399
    %v413 = vpack.c.b16 %v402, %v401
    %v414 = vpack.c.b16 %v404, %v403
    %v415 = vpack.c.b16 %v406, %v405
    %v416 = vpack.c.b16 %v408, %v407
    %425 = vmatprep.subr.bf16.mxu0 0
    %426 = vmatpush1.bf16.msra.mxu0 %v416
    %427 = vmatprep.subr.bf16.mxu0 0
    %428 = vmatpush1.bf16.msra.mxu0 %v415
    %429 = vmatprep.subr.bf16.mxu0 0
    %430 = vmatpush1.bf16.msra.mxu0 %v414
    %431 = vmatprep.subr.bf16.mxu0 0
    %432 = vmatpush1.bf16.msra.mxu0 %v413
    %433 = vmatprep.subr.bf16.mxu0 0
    %434 = vmatpush1.bf16.msra.mxu0 %v412
    %435 = vmatprep.subr.bf16.mxu0 0
    %436 = vmatpush1.bf16.msra.mxu0 %v411
    %437 = vmatprep.subr.bf16.mxu0 0
    %438 = vmatpush1.bf16.msra.mxu0 %v410
    %439 = vmatprep.subr.bf16.mxu0 0
    %440 = vmatpush1.bf16.msra.mxu0 %v409
    %441 = vmatprep.subr.bf16.mxu0 0
    %442 = vmatpush2.bf16.msra.mxu0 0
    %443 = vmatprep.subr.bf16.mxu0 0
    %444 = vmatpush2.bf16.msra.mxu0 0
    %445 = vmatprep.subr.bf16.mxu0 0
    %446 = vmatpush2.bf16.msra.mxu0 0
    %447 = vmatprep.subr.bf16.mxu0 0
    %448 = vmatpush2.bf16.msra.mxu0 0
    %449 = vmatprep.subr.bf16.mxu0 0
    %450 = vmatpush2.bf16.msra.mxu0 0
    %451 = vmatprep.subr.bf16.mxu0 0
    %452 = vmatpush2.bf16.msra.mxu0 0
    %453 = vmatprep.subr.bf16.mxu0 0
    %454 = vmatpush2.bf16.msra.mxu0 0
    %455 = vmatprep.subr.bf16.mxu0 0
    %456 = vmatpush2.bf16.msra.mxu0 0
    %457 = vmatprep.mubr.bf16.mxu0 0
    %458 = vmatmul.mubr.bf16.gmra.mxu0 %v353
    %v459 = vpop.f32.mrf.mxu0
    %v460 = vadd.f32 %v375, %v459
    %v461 = vpop.f32.mrf.mxu0
    %v462 = vpop.f32.mrf.mxu0
    %v463 = vpop.f32.mrf.mxu0
    %464 = vdwg.mxu0
    %465 = vst [vmem:[%s6] sm:$0xff] %v460
    // Predicated region
    $region26: #{forward.2} parent=1 // pred_check
      _
    $region27: #{forward.2} parent=1 // pred_check_branch
      %467 = sbr.rel (0) target = $region29
    $region28: #{forward.2} parent=1 // pred_region
      _
    $region29: #{forward.2} parent=1 // pred_fallthru
      _
    // Predicated region
    $region30: #{forward.2} parent=1 // pred_check
      _
    $region31: #{forward.2} parent=1 // pred_check_branch
      %469 = sbr.rel (0) target = $region33
    $region32: #{forward.2} parent=1 // pred_region
      _
    $region33: #{forward.2} parent=1 // pred_fallthru
      _
    %470 = vsyncpa [#allocation8], 1

</llo_original>
